<compile_context>
chip_gen: v6e
topology: v6e:2x2x1
jax: 0.10.0
libtpu: 0.0.40
codegen_flags: <defaults>
</compile_context>

<pallas_src>
import functools

import jax
import jax.numpy as jnp
from jax.experimental import pallas as pl
from jax.experimental.pallas import tpu as pltpu

STATE_SIZE = 4
ACTION_SIZE = 1
HIDDEN = 256
IN_DIM = STATE_SIZE + ACTION_SIZE      # 5
OUT_DIM = STATE_SIZE                   # 4
IN_PAD = 8                             # pad K of layer 1 to sublane granularity
OUT_PAD = 128                          # pad N of layer 4 to a full lane width
MAX_TB = 1024                          # cap on batch-tile rows (VMEM stays ~3 MB)


def _mlp_kernel(x_ref,
                w1_ref, b1_ref,
                w2_ref, b2_ref,
                w3_ref, b3_ref,
                w4_ref, b4_ref,
                o_ref):
    # x arrives as f32 (TB, 8); cast to bf16 only at the MXU inputs.
    x = x_ref[...].astype(jnp.bfloat16)

    h = jnp.dot(x, w1_ref[...], preferred_element_type=jnp.float32) + b1_ref[...]
    h = jnp.maximum(h, 0.0)                                          # f32 (TB, 256)

    h = jnp.dot(h.astype(jnp.bfloat16), w2_ref[...],
                preferred_element_type=jnp.float32) + b2_ref[...]
    h = jnp.maximum(h, 0.0)                                          # f32 (TB, 256)

    h = jnp.dot(h.astype(jnp.bfloat16), w3_ref[...],
                preferred_element_type=jnp.float32) + b3_ref[...]
    h = jnp.maximum(h, 0.0)                                          # f32 (TB, 256)

    out = jnp.dot(h.astype(jnp.bfloat16), w4_ref[...],
                  preferred_element_type=jnp.float32) + b4_ref[...]
    o_ref[...] = out.astype(o_ref.dtype)                             # f32 (TB, 128)


def prepare_params(params):
    """One-time: pad feature dims, cast weights to bf16, reshape biases.

    Keeping this out of model_forward removes the per-call pad/reshape XLA ops
    (which rival the kernel itself in the small-batch latency regime)."""
    (w1, b1), (w2, b2), (w3, b3), (w4, b4) = params
    w1_p = jnp.pad(w1, ((0, IN_PAD - IN_DIM), (0, 0)))               # (8, 256)
    w4_p = jnp.pad(w4, ((0, 0), (0, OUT_PAD - OUT_DIM)))             # (256, 128)
    b4_p = jnp.pad(b4, ((0, OUT_PAD - OUT_DIM),))                    # (128,)
    return (w1_p.astype(jnp.bfloat16), b1.reshape(1, -1).astype(jnp.float32),
            w2.astype(jnp.bfloat16),   b2.reshape(1, -1).astype(jnp.float32),
            w3.astype(jnp.bfloat16),   b3.reshape(1, -1).astype(jnp.float32),
            w4_p.astype(jnp.bfloat16), b4_p.reshape(1, -1).astype(jnp.float32))


@functools.partial(jax.jit, static_argnames=())
def model_forward(x, prepared_params):
    """Pallas-fused forward. x: (B, 5) f32. Returns (B, 4) f32."""
    B = x.shape[0]

    # --- input feature-dim padding (zeros; mathematically a no-op) -------
    x_p = jnp.pad(x, ((0, 0), (0, IN_PAD - IN_DIM)))                 # (B, 8) f32

    # --- batch tiling ------------------------------------------------------
    # At least 2 blocks when B > 8 so the "parallel" grid axis feeds both v7x
    # TensorCores; TB sized to the actual batch (rounded to 8 sublanes) so the
    # padding waste is minimal; capped at MAX_TB rows to bound VMEM.
    min_blocks = 2 if B > 8 else 1
    n_blocks = max(pl.cdiv(B, MAX_TB), min_blocks)
    TB = ((pl.cdiv(B, n_blocks) + 7) // 8) * 8
    n_blocks = pl.cdiv(B, TB)
    B_pad = n_blocks * TB
    if B_pad != B:
        x_p = jnp.pad(x_p, ((0, B_pad - B), (0, 0)))

    args = (x_p,) + tuple(prepared_params)

    # x / out blocked over the batch; weights & biases use a constant (0, 0)
    # block index so they stay resident in VMEM across all grid steps.
    x_spec = pl.BlockSpec((TB, IN_PAD), lambda i: (i, 0))
    resident_specs = [pl.BlockSpec(a.shape, lambda i: (0, 0)) for a in args[1:]]
    in_specs = [x_spec] + resident_specs
    out_spec = pl.BlockSpec((TB, OUT_PAD), lambda i: (i, 0))

    flops = 2 * B_pad * (IN_PAD * HIDDEN + 2 * HIDDEN * HIDDEN + HIDDEN * OUT_PAD)
    bytes_accessed = (4 * x_p.size
                      + sum(int(a.size) * a.dtype.itemsize for a in args[1:])
                      + 4 * B_pad * OUT_PAD)

    out_padded = pl.pallas_call(
        _mlp_kernel,
        out_shape=jax.ShapeDtypeStruct((B_pad, OUT_PAD), jnp.float32),
        grid=(n_blocks,),
        in_specs=in_specs,
        out_specs=out_spec,
        compiler_params=pltpu.CompilerParams(
            dimension_semantics=("parallel",)),   # shard batch grid over v7x's 2 TCs
        cost_estimate=pl.CostEstimate(
            flops=flops, transcendentals=0, bytes_accessed=bytes_accessed),
    )(*args)

    return out_padded[:B, :OUT_DIM]


def init_params(key):
    """Deterministic init mimicking nn.Linear defaults (uniform +/- 1/sqrt(fan_in))."""
    dims = [(IN_DIM, HIDDEN), (HIDDEN, HIDDEN), (HIDDEN, HIDDEN), (HIDDEN, OUT_DIM)]
    params = []
    for (fan_in, fan_out) in dims:
        key, kw, kb = jax.random.split(key, 3)
        bound = 1.0 / jnp.sqrt(jnp.float32(fan_in))
        w = jax.random.uniform(kw, (fan_in, fan_out), jnp.float32, -bound, bound)
        b = jax.random.uniform(kb, (fan_out,), jnp.float32, -bound, bound)
        params.append((w, b))
    return params


def reference_forward_f32(x, params):
    h = x
    for i, (w, b) in enumerate(params):
        h = h @ w + b
        if i < len(params) - 1:
            h = jnp.maximum(h, 0.0)
    return h


def reference_forward_bf16(x, params):
    """Emulates the kernel's numerics: bf16 matmul inputs, f32 accumulation."""
    h = x
    for i, (w, b) in enumerate(params):
        h = jnp.dot(h.astype(jnp.bfloat16), w.astype(jnp.bfloat16),
                    preferred_element_type=jnp.float32) + b
        if i < len(params) - 1:
            h = jnp.maximum(h, 0.0)
    return h


if __name__ == "__main__":
    key = jax.random.PRNGKey(0)
    key, kx_small, kx_mid = jax.random.split(key, 3)
    params = init_params(key)
    prepared = prepare_params(params)

    # Tiny-batch path (single grid step, 8 rows).
    B_small = 8
    x_small = jax.random.normal(kx_small, (B_small, IN_DIM), jnp.float32)
    out_small = jax.block_until_ready(model_forward(x_small, prepared))
    assert out_small.shape == (B_small, OUT_DIM)
    assert jnp.allclose(out_small, reference_forward_bf16(x_small, params),
                        atol=1e-2, rtol=1e-2), "small-batch mismatch vs bf16 reference"
    assert jnp.allclose(out_small, reference_forward_f32(x_small, params),
                        atol=5e-2, rtol=5e-2), "small-batch mismatch vs f32 reference"

    # Awkward-size batch: B=300 -> TB=152, grid=(2,), B_pad=304 (minimal padding,
    # both v7x TensorCores active).
    B_mid = 300
    x_mid = jax.random.normal(kx_mid, (B_mid, IN_DIM), jnp.float32)
    out_mid = jax.block_until_ready(model_forward(x_mid, prepared))
    assert out_mid.shape == (B_mid, OUT_DIM)
    assert jnp.allclose(out_mid, reference_forward_bf16(x_mid, params),
                        atol=1e-2, rtol=1e-2), "mid-batch mismatch vs bf16 reference"
    assert jnp.allclose(out_mid, reference_forward_f32(x_mid, params),
                        atol=5e-2, rtol=5e-2), "mid-batch mismatch vs f32 reference"

    print("KERNEL_OK")
</pallas_src>

<mosaic_0001>
module attributes {stable_mosaic.version = 11 : i64} {
  func.func @_mlp_kernel(%arg0: i32, %arg1: memref<8x8xf32, #tpu.memory_space<vmem>>, %arg2: memref<8x256xbf16, #tpu.memory_space<vmem>>, %arg3: memref<1x256xf32, #tpu.memory_space<vmem>>, %arg4: memref<256x256xbf16, #tpu.memory_space<vmem>>, %arg5: memref<1x256xf32, #tpu.memory_space<vmem>>, %arg6: memref<256x256xbf16, #tpu.memory_space<vmem>>, %arg7: memref<1x256xf32, #tpu.memory_space<vmem>>, %arg8: memref<256x128xbf16, #tpu.memory_space<vmem>>, %arg9: memref<1x128xf32, #tpu.memory_space<vmem>>, %arg10: memref<8x128xf32, #tpu.memory_space<vmem>>) attributes {dimension_semantics = [#tpu.dimension_semantics<parallel>], iteration_bounds = array<i64: 1>, scalar_prefetch = 0 : i64, scratch_operands = 0 : i64, tpu.core_type = #tpu.core_type<tc>, window_params = [{transform_indices = @transform_0, window_bounds = array<i64: 8, 8>}, {pipeline_mode = #tpu.pipeline_mode<synchronous>, transform_indices = @transform_1, window_bounds = array<i64: 8, 256>}, {pipeline_mode = #tpu.pipeline_mode<synchronous>, transform_indices = @transform_2, window_bounds = array<i64: 1, 256>}, {pipeline_mode = #tpu.pipeline_mode<synchronous>, transform_indices = @transform_3, window_bounds = array<i64: 256, 256>}, {pipeline_mode = #tpu.pipeline_mode<synchronous>, transform_indices = @transform_4, window_bounds = array<i64: 1, 256>}, {pipeline_mode = #tpu.pipeline_mode<synchronous>, transform_indices = @transform_5, window_bounds = array<i64: 256, 256>}, {pipeline_mode = #tpu.pipeline_mode<synchronous>, transform_indices = @transform_6, window_bounds = array<i64: 1, 256>}, {pipeline_mode = #tpu.pipeline_mode<synchronous>, transform_indices = @transform_7, window_bounds = array<i64: 256, 128>}, {pipeline_mode = #tpu.pipeline_mode<synchronous>, transform_indices = @transform_8, window_bounds = array<i64: 1, 128>}, {transform_indices = @transform_9, window_bounds = array<i64: 8, 128>}]} {
    %c0 = arith.constant 0 : index
    %c0_0 = arith.constant 0 : index
    %0 = vector.load %arg1[%c0, %c0_0] : memref<8x8xf32, #tpu.memory_space<vmem>>, vector<8x8xf32>
    %1 = arith.truncf %0 : vector<8x8xf32> to vector<8x8xbf16>
    %c0_1 = arith.constant 0 : index
    %c0_2 = arith.constant 0 : index
    %2 = vector.load %arg2[%c0_1, %c0_2] : memref<8x256xbf16, #tpu.memory_space<vmem>>, vector<8x256xbf16>
    %cst = arith.constant dense<0.000000e+00> : vector<8x256xf32>
    %3 = tpu.matmul %1, %2, %cst {dimension_numbers = #tpu.dot_dimension_numbers<[1], [0], [0], [1], [0, 0, 1, 1], [], []>} : vector<8x8xbf16>, vector<8x256xbf16>, vector<8x256xf32> -> vector<8x256xf32>
    %c0_3 = arith.constant 0 : index
    %c0_4 = arith.constant 0 : index
    %4 = vector.load %arg3[%c0_3, %c0_4] : memref<1x256xf32, #tpu.memory_space<vmem>>, vector<1x256xf32>
    %5 = vector.broadcast %4 : vector<1x256xf32> to vector<8x256xf32>
    %6 = arith.addf %3, %5 : vector<8x256xf32>
    %cst_5 = arith.constant 0.000000e+00 : f32
    %7 = vector.broadcast %cst_5 : f32 to vector<8x256xf32>
    %8 = arith.maximumf %6, %7 : vector<8x256xf32>
    %9 = arith.truncf %8 : vector<8x256xf32> to vector<8x256xbf16>
    %c0_6 = arith.constant 0 : index
    %c0_7 = arith.constant 0 : index
    %10 = vector.load %arg4[%c0_6, %c0_7] : memref<256x256xbf16, #tpu.memory_space<vmem>>, vector<256x256xbf16>
    %cst_8 = arith.constant dense<0.000000e+00> : vector<8x256xf32>
    %11 = tpu.matmul %9, %10, %cst_8 {dimension_numbers = #tpu.dot_dimension_numbers<[1], [0], [0], [1], [0, 0, 1, 1], [], []>} : vector<8x256xbf16>, vector<256x256xbf16>, vector<8x256xf32> -> vector<8x256xf32>
    %c0_9 = arith.constant 0 : index
    %c0_10 = arith.constant 0 : index
    %12 = vector.load %arg5[%c0_9, %c0_10] : memref<1x256xf32, #tpu.memory_space<vmem>>, vector<1x256xf32>
    %13 = vector.broadcast %12 : vector<1x256xf32> to vector<8x256xf32>
    %14 = arith.addf %11, %13 : vector<8x256xf32>
    %cst_11 = arith.constant 0.000000e+00 : f32
    %15 = vector.broadcast %cst_11 : f32 to vector<8x256xf32>
    %16 = arith.maximumf %14, %15 : vector<8x256xf32>
    %17 = arith.truncf %16 : vector<8x256xf32> to vector<8x256xbf16>
    %c0_12 = arith.constant 0 : index
    %c0_13 = arith.constant 0 : index
    %18 = vector.load %arg6[%c0_12, %c0_13] : memref<256x256xbf16, #tpu.memory_space<vmem>>, vector<256x256xbf16>
    %cst_14 = arith.constant dense<0.000000e+00> : vector<8x256xf32>
    %19 = tpu.matmul %17, %18, %cst_14 {dimension_numbers = #tpu.dot_dimension_numbers<[1], [0], [0], [1], [0, 0, 1, 1], [], []>} : vector<8x256xbf16>, vector<256x256xbf16>, vector<8x256xf32> -> vector<8x256xf32>
    %c0_15 = arith.constant 0 : index
    %c0_16 = arith.constant 0 : index
    %20 = vector.load %arg7[%c0_15, %c0_16] : memref<1x256xf32, #tpu.memory_space<vmem>>, vector<1x256xf32>
    %21 = vector.broadcast %20 : vector<1x256xf32> to vector<8x256xf32>
    %22 = arith.addf %19, %21 : vector<8x256xf32>
    %cst_17 = arith.constant 0.000000e+00 : f32
    %23 = vector.broadcast %cst_17 : f32 to vector<8x256xf32>
    %24 = arith.maximumf %22, %23 : vector<8x256xf32>
    %25 = arith.truncf %24 : vector<8x256xf32> to vector<8x256xbf16>
    %c0_18 = arith.constant 0 : index
    %c0_19 = arith.constant 0 : index
    %26 = vector.load %arg8[%c0_18, %c0_19] : memref<256x128xbf16, #tpu.memory_space<vmem>>, vector<256x128xbf16>
    %cst_20 = arith.constant dense<0.000000e+00> : vector<8x128xf32>
    %27 = tpu.matmul %25, %26, %cst_20 {dimension_numbers = #tpu.dot_dimension_numbers<[1], [0], [0], [1], [0, 0, 1, 1], [], []>} : vector<8x256xbf16>, vector<256x128xbf16>, vector<8x128xf32> -> vector<8x128xf32>
    %c0_21 = arith.constant 0 : index
    %c0_22 = arith.constant 0 : index
    %28 = vector.load %arg9[%c0_21, %c0_22] : memref<1x128xf32, #tpu.memory_space<vmem>>, vector<1x128xf32>
    %29 = vector.broadcast %28 : vector<1x128xf32> to vector<8x128xf32>
    %30 = arith.addf %27, %29 : vector<8x128xf32>
    %c0_23 = arith.constant 0 : index
    %c0_24 = arith.constant 0 : index
    %31 = vector.load %arg10[%c0_23, %c0_24] : memref<8x128xf32, #tpu.memory_space<vmem>>, vector<8x128xf32>
    tpu.vector_store %arg10[%c0_23, %c0_24], %30 {strides = array<i32>} : memref<8x128xf32, #tpu.memory_space<vmem>>, vector<8x128xf32>,
    return
  }
  func.func @transform_0(%arg0: i32) -> (i32, i32) {
    %c0_i32 = arith.constant 0 : i32
    %c0_i32_0 = arith.constant 0 : i32
    return %arg0, %c0_i32 : i32, i32
  }
  func.func @transform_1(%arg0: i32) -> (i32, i32) {
    %c0_i32 = arith.constant 0 : i32
    %c0_i32_0 = arith.constant 0 : i32
    %c0_i32_1 = arith.constant 0 : i32
    return %c0_i32, %c0_i32_0 : i32, i32
  }
  func.func @transform_2(%arg0: i32) -> (i32, i32) {
    %c0_i32 = arith.constant 0 : i32
    %c0_i32_0 = arith.constant 0 : i32
    %c0_i32_1 = arith.constant 0 : i32
    return %c0_i32, %c0_i32_0 : i32, i32
  }
  func.func @transform_3(%arg0: i32) -> (i32, i32) {
    %c0_i32 = arith.constant 0 : i32
    %c0_i32_0 = arith.constant 0 : i32
    %c0_i32_1 = arith.constant 0 : i32
    return %c0_i32, %c0_i32_0 : i32, i32
  }
  func.func @transform_4(%arg0: i32) -> (i32, i32) {
    %c0_i32 = arith.constant 0 : i32
    %c0_i32_0 = arith.constant 0 : i32
    %c0_i32_1 = arith.constant 0 : i32
    return %c0_i32, %c0_i32_0 : i32, i32
  }
  func.func @transform_5(%arg0: i32) -> (i32, i32) {
    %c0_i32 = arith.constant 0 : i32
    %c0_i32_0 = arith.constant 0 : i32
    %c0_i32_1 = arith.constant 0 : i32
    return %c0_i32, %c0_i32_0 : i32, i32
  }
  func.func @transform_6(%arg0: i32) -> (i32, i32) {
    %c0_i32 = arith.constant 0 : i32
    %c0_i32_0 = arith.constant 0 : i32
    %c0_i32_1 = arith.constant 0 : i32
    return %c0_i32, %c0_i32_0 : i32, i32
  }
  func.func @transform_7(%arg0: i32) -> (i32, i32) {
    %c0_i32 = arith.constant 0 : i32
    %c0_i32_0 = arith.constant 0 : i32
    %c0_i32_1 = arith.constant 0 : i32
    return %c0_i32, %c0_i32_0 : i32, i32
  }
  func.func @transform_8(%arg0: i32) -> (i32, i32) {
    %c0_i32 = arith.constant 0 : i32
    %c0_i32_0 = arith.constant 0 : i32
    %c0_i32_1 = arith.constant 0 : i32
    return %c0_i32, %c0_i32_0 : i32, i32
  }
  func.func @transform_9(%arg0: i32) -> (i32, i32) {
    %c0_i32 = arith.constant 0 : i32
    %c0_i32_0 = arith.constant 0 : i32
    return %arg0, %c0_i32 : i32, i32
  }
}

</mosaic_0001>

<llo_original>
// kernel: model_forward.1
$region0: #{model_forward.1}
  #allocation0 [shape = 'u32[]', space=smem, size = 0x4, offset = 0x4, fixed_abs, tag = 'smem constant byte address 0x4 - core index']
  #allocation1 [shape = 'u32[144,128]{1,0:T(1,128)}', space=vmem, size = 0x12000, scoped, tag = 'internal scratch']
  %s0 = inlined_call_operand.vmem [shape: f32[8,8], index: 0, kind: input, shape index: {}]
  %s1 = inlined_call_operand.vmem [shape: bf16[8,256], index: 1, kind: input, shape index: {}]
  %s2 = inlined_call_operand.vmem [shape: f32[1,256], index: 2, kind: input, shape index: {}]
  %s3 = inlined_call_operand.hbm [shape: bf16[256,256], index: 3, kind: input, shape index: {}]
  %s4 = inlined_call_operand.vmem [shape: f32[1,256], index: 4, kind: input, shape index: {}]
  %s5 = inlined_call_operand.hbm [shape: bf16[256,256], index: 5, kind: input, shape index: {}]
  %s6 = inlined_call_operand.vmem [shape: f32[1,256], index: 6, kind: input, shape index: {}]
  %s7 = inlined_call_operand.hbm [shape: bf16[256,128], index: 7, kind: input, shape index: {}]
  %s8 = inlined_call_operand.vmem [shape: f32[1,128], index: 8, kind: input, shape index: {}]
  %s9 = inlined_call_operand.vmem [shape: f32[8,128], index: 9, kind: output, shape index: {}]
  %s10 = sld [smem:[#allocation0]]
  $region58: #{model_forward.1} parent=0
    _
  %s12 = ssub.s32 1, %s10
  %s13 = scalar_select 0, %s12, %s10
  $region1: #{model_forward.1} parent=0
    #allocation2 [shape = 'u8[131072]{0}', space=vmem, size = 0x20000, scoped, tag = 'input window, operand 3, single buffered']
    #allocation3 [shape = 's32[1]{0}', space=sflag, size = 0x4, scoped, tag = 'scoped memory for model_forward.1']
    #allocation4 [shape = 'u8[131072]{0}', space=vmem, size = 0x20000, scoped, tag = 'input window, operand 5, single buffered']
    #allocation5 [shape = 's32[1]{0}', space=sflag, size = 0x4, scoped, tag = 'scoped memory for model_forward.1']
    #allocation6 [shape = 'u8[65536]{0}', space=vmem, size = 0x10000, scoped, tag = 'input window, operand 7, single buffered']
    %14 = vsyncpa [#allocation3], 0
    %15 = vsyncpa [#allocation5], 0
    // Predicated region
    $region2: #{model_forward.1} parent=1 // pred_check
      _
    $region3: #{model_forward.1} parent=1 // pred_check_branch
      %17 = sbr.rel (0) target = $region5
    $region4: #{model_forward.1} parent=1 // pred_region
      _
    $region5: #{model_forward.1} parent=1 // pred_fallthru
      _
    // Predicated region
    $region6: #{model_forward.1} parent=1 // pred_check
      _
    $region7: #{model_forward.1} parent=1 // pred_check_branch
      %19 = sbr.rel (0) target = $region9
    $region8: #{model_forward.1} parent=1 // pred_region
      _
    $region9: #{model_forward.1} parent=1 // pred_fallthru
      _
    // Predicated region
    $region10: #{model_forward.1} parent=1 // pred_check
      _
    $region11: #{model_forward.1} parent=1 // pred_check_branch
      %21 = sbr.rel (0) target = $region13
    $region12: #{model_forward.1} parent=1 // pred_region
      _
    $region13: #{model_forward.1} parent=1 // pred_fallthru
      _
    // Predicated region
    $region14: #{model_forward.1} parent=1 // pred_check
      _
    $region15: #{model_forward.1} parent=1 // pred_check_branch
      %23 = sbr.rel (0) target = $region17
    $region16: #{model_forward.1} parent=1 // pred_region
      %s25 = ssub.s32 4096, 4096
      %26 = vsyncadd [#allocation3], %s25
      %s27 = sshll.u32 [#allocation2], 4
      %s28 = int_to_ptr.vmem [resolvable:$true] %s27
      %33 = dma.hbm_to_vmem [thread:$0]  %s3, 4096, %s28, [#allocation3], 128, 128, 8
    $region17: #{model_forward.1} parent=1 // pred_fallthru
      _
    // Predicated region
    $region18: #{model_forward.1} parent=1 // pred_check
      _
    $region19: #{model_forward.1} parent=1 // pred_check_branch
      %35 = sbr.rel (0) target = $region21
    $region20: #{model_forward.1} parent=1 // pred_region
      _
    $region21: #{model_forward.1} parent=1 // pred_fallthru
      _
    // Predicated region
    $region22: #{model_forward.1} parent=1 // pred_check
      _
    $region23: #{model_forward.1} parent=1 // pred_check_branch
      %37 = sbr.rel (0) target = $region25
    $region24: #{model_forward.1} parent=1 // pred_region
      %s39 = ssub.s32 4096, 4096
      %40 = vsyncadd [#allocation5], %s39
      %s41 = sshll.u32 [#allocation4], 4
      %s42 = int_to_ptr.vmem [resolvable:$true] %s41
      %47 = dma.hbm_to_vmem [thread:$0]  %s5, 4096, %s42, [#allocation5], 128, 128, 8
    $region25: #{model_forward.1} parent=1 // pred_fallthru
      _
    // Predicated region
    $region26: #{model_forward.1} parent=1 // pred_check
      _
    $region27: #{model_forward.1} parent=1 // pred_check_branch
      %49 = sbr.rel (0) target = $region29
    $region28: #{model_forward.1} parent=1 // pred_region
      _
    $region29: #{model_forward.1} parent=1 // pred_fallthru
      _
    // Predicated region
    $region30: #{model_forward.1} parent=1 // pred_check
      _
    $region31: #{model_forward.1} parent=1 // pred_check_branch
      %51 = sbr.rel (0) target = $region33
    $region32: #{model_forward.1} parent=1 // pred_region
      %s53 = ssub.s32 2048, 2048
      %54 = vsyncadd [#allocation5], %s53
      %s55 = sshll.u32 [#allocation6], 4
      %s56 = int_to_ptr.vmem [resolvable:$true] %s55
      %61 = dma.hbm_to_vmem [thread:$0]  %s7, 2048, %s56, [#allocation5], 64, 64, 4
    $region33: #{model_forward.1} parent=1 // pred_fallthru
      _
    // Predicated region
    $region34: #{model_forward.1} parent=1 // pred_check
      _
    $region35: #{model_forward.1} parent=1 // pred_check_branch
      %63 = sbr.rel (0) target = $region37
    $region36: #{model_forward.1} parent=1 // pred_region
      _
    $region37: #{model_forward.1} parent=1 // pred_fallthru
      _
    // Predicated region
    $region38: #{model_forward.1} parent=1 // pred_check
      _
    $region39: #{model_forward.1} parent=1 // pred_check_branch
      %65 = sbr.rel (0) target = $region41
    $region40: #{model_forward.1} parent=1 // pred_region
      %66 = dma.done [#allocation3], 4096
    $region41: #{model_forward.1} parent=1 // pred_fallthru
      _
    // Predicated region
    $region42: #{model_forward.1} parent=1 // pred_check
      _
    $region43: #{model_forward.1} parent=1 // pred_check_branch
      %68 = sbr.rel (0) target = $region45
    $region44: #{model_forward.1} parent=1 // pred_region
      %69 = dma.done [#allocation5], 4096
    $region45: #{model_forward.1} parent=1 // pred_fallthru
      _
    // Predicated region
    $region46: #{model_forward.1} parent=1 // pred_check
      _
    $region47: #{model_forward.1} parent=1 // pred_check_branch
      %71 = sbr.rel (0) target = $region49
    $region48: #{model_forward.1} parent=1 // pred_region
      %72 = dma.done [#allocation5], 2048
    $region49: #{model_forward.1} parent=1 // pred_fallthru
      _
    %v74 = vld [vmem:[%s0] sm:$0xff]
    %v75 = vpack.c.bf16 %v74, %v74
    %v76 = vld [vmem:[%s1] sm:$0xff]
    %v77 = vld [vmem:[%s2] sm:$0x3]
    %v79 = vlaneseq
    %v80 = vshrl.u32 %v79, 7
    %v81 = vsub.s32 0, %v80
    %v82 = vrot.slane %v77, %v81
    %v83 = vlaneseq
    %v84 = vshrl.u32 %v83, 7
    %v85 = vsub.s32 1, %v84
    %v86 = vrot.slane %v77, %v85
    %v90 = vunpack.c.l.b16 %v76
    %v91 = vunpack.c.h.b16 %v76
    %v92 = vpack.c.b16 %v90, %v90
    %v93 = vpack.c.b16 %v91, %v91
    %vm94 = vcmask 64512
    %v96 = vsel %vm94, %v75, 0
    %vm98 = vcmask 1043456
    %v100 = vsel %vm98, %v92, 0
    %v103 = vsel %vm98, %v93, 0
    %105 = vmatprep.subr.bf16.mxu0 0
    %106 = vmatpush1.bf16.msra.mxu0 0
    %107 = vmatprep.subr.bf16.mxu0 0
    %108 = vmatpush1.bf16.msra.mxu0 0
    %109 = vmatprep.subr.bf16.mxu0 0
    %110 = vmatpush1.bf16.msra.mxu0 0
    %111 = vmatprep.subr.bf16.mxu0 0
    %112 = vmatpush1.bf16.msra.mxu0 0
    %113 = vmatprep.subr.bf16.mxu0 0
    %114 = vmatpush1.bf16.msra.mxu0 0
    %115 = vmatprep.subr.bf16.mxu0 0
    %116 = vmatpush1.bf16.msra.mxu0 0
    %117 = vmatprep.subr.bf16.mxu0 0
    %118 = vmatpush1.bf16.msra.mxu0 0
    %119 = vmatprep.subr.bf16.mxu0 %v103
    %120 = vmatpush1.bf16.msra.mxu0 %v100
    %121 = vmatprep.subr.bf16.mxu0 0
    %122 = vmatpush2.bf16.msra.mxu0 0
    %123 = vmatprep.subr.bf16.mxu0 0
    %124 = vmatpush2.bf16.msra.mxu0 0
    %125 = vmatprep.subr.bf16.mxu0 0
    %126 = vmatpush2.bf16.msra.mxu0 0
    %127 = vmatprep.subr.bf16.mxu0 0
    %128 = vmatpush2.bf16.msra.mxu0 0
    %129 = vmatprep.subr.bf16.mxu0 0
    %130 = vmatpush2.bf16.msra.mxu0 0
    %131 = vmatprep.subr.bf16.mxu0 0
    %132 = vmatpush2.bf16.msra.mxu0 0
    %133 = vmatprep.subr.bf16.mxu0 0
    %134 = vmatpush2.bf16.msra.mxu0 0
    %135 = vmatprep.subr.bf16.mxu0 0
    %136 = vmatpush2.bf16.msra.mxu0 0
    %137 = vmatprep.mubr.bf16.mxu0 0
    %138 = vmatmul.mubr.bf16.gmra.mxu0 %v96
    %v139 = vpop.f32.mrf.mxu0
    %v140 = vadd.f32 %v82, %v139
    %v141 = vpop.f32.mrf.mxu0
    %v142 = vadd.f32 %v86, %v141
    %v143 = vpop.f32.mrf.mxu0
    %v144 = vpop.f32.mrf.mxu0
    %145 = vdwg.mxu0
    %v146 = vmax.f32 %v140, 0.0
    %v147 = vmax.f32 %v142, 0.0
    %v148 = vpack.c.bf16 %v146, %v146
    %v149 = vpack.c.bf16 %v147, %v147
    %v150 = vld [vmem:[#allocation2] sm:$0xff]
    %v151 = vld [vmem:[#allocation2 + $0x8] sm:$0xff]
    %v152 = vld [vmem:[#allocation2 + $0x10] sm:$0xff]
    %v153 = vld [vmem:[#allocation2 + $0x18] sm:$0xff]
    %v154 = vld [vmem:[#allocation2 + $0x20] sm:$0xff]
    %v155 = vld [vmem:[#allocation2 + $0x28] sm:$0xff]
    %v156 = vld [vmem:[#allocation2 + $0x30] sm:$0xff]
    %v157 = vld [vmem:[#allocation2 + $0x38] sm:$0xff]
    %v158 = vld [vmem:[#allocation2 + $0x40] sm:$0xff]
    %v159 = vld [vmem:[#allocation2 + $0x48] sm:$0xff]
    %v160 = vld [vmem:[#allocation2 + $0x50] sm:$0xff]
    %v161 = vld [vmem:[#allocation2 + $0x58] sm:$0xff]
    %v162 = vld [vmem:[#allocation2 + $0x60] sm:$0xff]
    %v163 = vld [vmem:[#allocation2 + $0x68] sm:$0xff]
    %v164 = vld [vmem:[#allocation2 + $0x70] sm:$0xff]
    %v165 = vld [vmem:[#allocation2 + $0x78] sm:$0xff]
    %v166 = vld [vmem:[#allocation2 + $0x80] sm:$0xff]
    %v167 = vld [vmem:[#allocation2 + $0x88] sm:$0xff]
    %v168 = vld [vmem:[#allocation2 + $0x90] sm:$0xff]
    %v169 = vld [vmem:[#allocation2 + $0x98] sm:$0xff]
    %v170 = vld [vmem:[#allocation2 + $0xa0] sm:$0xff]
    %v171 = vld [vmem:[#allocation2 + $0xa8] sm:$0xff]
    %v172 = vld [vmem:[#allocation2 + $0xb0] sm:$0xff]
    %v173 = vld [vmem:[#allocation2 + $0xb8] sm:$0xff]
    %v174 = vld [vmem:[#allocation2 + $0xc0] sm:$0xff]
    %v175 = vld [vmem:[#allocation2 + $0xc8] sm:$0xff]
    %v176 = vld [vmem:[#allocation2 + $0xd0] sm:$0xff]
    %v177 = vld [vmem:[#allocation2 + $0xd8] sm:$0xff]
    %v178 = vld [vmem:[#allocation2 + $0xe0] sm:$0xff]
    %v179 = vld [vmem:[#allocation2 + $0xe8] sm:$0xff]
    %v180 = vld [vmem:[#allocation2 + $0xf0] sm:$0xff]
    %v181 = vld [vmem:[#allocation2 + $0xf8] sm:$0xff]
    %v182 = vld [vmem:[%s4] sm:$0x3]
    %v184 = vlaneseq
    %v185 = vshrl.u32 %v184, 7
    %v186 = vsub.s32 0, %v185
    %v187 = vrot.slane %v182, %v186
    %v188 = vlaneseq
    %v189 = vshrl.u32 %v188, 7
    %v190 = vsub.s32 1, %v189
    %v191 = vrot.slane %v182, %v190
    %v226 = vunpack.c.l.b16 %v150
    %v227 = vunpack.c.h.b16 %v150
    %v228 = vunpack.c.l.b16 %v151
    %v229 = vunpack.c.h.b16 %v151
    %v230 = vunpack.c.l.b16 %v152
    %v231 = vunpack.c.h.b16 %v152
    %v232 = vunpack.c.l.b16 %v153
    %v233 = vunpack.c.h.b16 %v153
    %v234 = vunpack.c.l.b16 %v154
    %v235 = vunpack.c.h.b16 %v154
    %v236 = vunpack.c.l.b16 %v155
    %v237 = vunpack.c.h.b16 %v155
    %v238 = vunpack.c.l.b16 %v156
    %v239 = vunpack.c.h.b16 %v156
    %v240 = vunpack.c.l.b16 %v157
    %v241 = vunpack.c.h.b16 %v157
    %v242 = vunpack.c.l.b16 %v158
    %v243 = vunpack.c.h.b16 %v158
    %v244 = vunpack.c.l.b16 %v159
    %v245 = vunpack.c.h.b16 %v159
    %v246 = vunpack.c.l.b16 %v160
    %v247 = vunpack.c.h.b16 %v160
    %v248 = vunpack.c.l.b16 %v161
    %v249 = vunpack.c.h.b16 %v161
    %v250 = vunpack.c.l.b16 %v162
    %v251 = vunpack.c.h.b16 %v162
    %v252 = vunpack.c.l.b16 %v163
    %v253 = vunpack.c.h.b16 %v163
    %v254 = vunpack.c.l.b16 %v164
    %v255 = vunpack.c.h.b16 %v164
    %v256 = vunpack.c.l.b16 %v165
    %v257 = vunpack.c.h.b16 %v165
    %v258 = vunpack.c.l.b16 %v166
    %v259 = vunpack.c.h.b16 %v166
    %v260 = vunpack.c.l.b16 %v167
    %v261 = vunpack.c.h.b16 %v167
    %v262 = vunpack.c.l.b16 %v168
    %v263 = vunpack.c.h.b16 %v168
    %v264 = vunpack.c.l.b16 %v169
    %v265 = vunpack.c.h.b16 %v169
    %v266 = vunpack.c.l.b16 %v170
    %v267 = vunpack.c.h.b16 %v170
    %v268 = vunpack.c.l.b16 %v171
    %v269 = vunpack.c.h.b16 %v171
    %v270 = vunpack.c.l.b16 %v172
    %v271 = vunpack.c.h.b16 %v172
    %v272 = vunpack.c.l.b16 %v173
    %v273 = vunpack.c.h.b16 %v173
    %v274 = vunpack.c.l.b16 %v174
    %v275 = vunpack.c.h.b16 %v174
    %v276 = vunpack.c.l.b16 %v175
    %v277 = vunpack.c.h.b16 %v175
    %v278 = vunpack.c.l.b16 %v176
    %v279 = vunpack.c.h.b16 %v176
    %v280 = vunpack.c.l.b16 %v177
    %v281 = vunpack.c.h.b16 %v177
    %v282 = vunpack.c.l.b16 %v178
    %v283 = vunpack.c.h.b16 %v178
    %v284 = vunpack.c.l.b16 %v179
    %v285 = vunpack.c.h.b16 %v179
    %v286 = vunpack.c.l.b16 %v180
    %v287 = vunpack.c.h.b16 %v180
    %v288 = vunpack.c.l.b16 %v181
    %v289 = vunpack.c.h.b16 %v181
    %v290 = vpack.c.b16 %v228, %v226
    %v291 = vpack.c.b16 %v229, %v227
    %v292 = vpack.c.b16 %v232, %v230
    %v293 = vpack.c.b16 %v233, %v231
    %v294 = vpack.c.b16 %v236, %v234
    %v295 = vpack.c.b16 %v237, %v235
    %v296 = vpack.c.b16 %v240, %v238
    %v297 = vpack.c.b16 %v241, %v239
    %v298 = vpack.c.b16 %v244, %v242
    %v299 = vpack.c.b16 %v245, %v243
    %v300 = vpack.c.b16 %v248, %v246
    %v301 = vpack.c.b16 %v249, %v247
    %v302 = vpack.c.b16 %v252, %v250
    %v303 = vpack.c.b16 %v253, %v251
    %v304 = vpack.c.b16 %v256, %v254
    %v305 = vpack.c.b16 %v257, %v255
    %v306 = vpack.c.b16 %v260, %v258
    %v307 = vpack.c.b16 %v261, %v259
    %v308 = vpack.c.b16 %v264, %v262
    %v309 = vpack.c.b16 %v265, %v263
    %v310 = vpack.c.b16 %v268, %v266
    %v311 = vpack.c.b16 %v269, %v267
    %v312 = vpack.c.b16 %v272, %v270
    %v313 = vpack.c.b16 %v273, %v271
    %v314 = vpack.c.b16 %v276, %v274
    %v315 = vpack.c.b16 %v277, %v275
    %v316 = vpack.c.b16 %v280, %v278
    %v317 = vpack.c.b16 %v281, %v279
    %v318 = vpack.c.b16 %v284, %v282
    %v319 = vpack.c.b16 %v285, %v283
    %v320 = vpack.c.b16 %v288, %v286
    %v321 = vpack.c.b16 %v289, %v287
    %354 = vmatprep.subr.bf16.mxu0 %v305
    %355 = vmatpush1.bf16.msra.mxu0 %v304
    %356 = vmatprep.subr.bf16.mxu0 %v303
    %357 = vmatpush1.bf16.msra.mxu0 %v302
    %358 = vmatprep.subr.bf16.mxu0 %v301
    %359 = vmatpush1.bf16.msra.mxu0 %v300
    %360 = vmatprep.subr.bf16.mxu0 %v299
    %361 = vmatpush1.bf16.msra.mxu0 %v298
    %362 = vmatprep.subr.bf16.mxu0 %v297
    %363 = vmatpush1.bf16.msra.mxu0 %v296
    %364 = vmatprep.subr.bf16.mxu0 %v295
    %365 = vmatpush1.bf16.msra.mxu0 %v294
    %366 = vmatprep.subr.bf16.mxu0 %v293
    %367 = vmatpush1.bf16.msra.mxu0 %v292
    %368 = vmatprep.subr.bf16.mxu0 %v291
    %369 = vmatpush1.bf16.msra.mxu0 %v290
    %370 = vmatprep.subr.bf16.mxu0 %v321
    %371 = vmatpush2.bf16.msra.mxu0 %v320
    %372 = vmatprep.subr.bf16.mxu0 %v319
    %373 = vmatpush2.bf16.msra.mxu0 %v318
    %374 = vmatprep.subr.bf16.mxu0 %v317
    %375 = vmatpush2.bf16.msra.mxu0 %v316
    %376 = vmatprep.subr.bf16.mxu0 %v315
    %377 = vmatpush2.bf16.msra.mxu0 %v314
    %378 = vmatprep.subr.bf16.mxu0 %v313
    %379 = vmatpush2.bf16.msra.mxu0 %v312
    %380 = vmatprep.subr.bf16.mxu0 %v311
    %381 = vmatpush2.bf16.msra.mxu0 %v310
    %382 = vmatprep.subr.bf16.mxu0 %v309
    %383 = vmatpush2.bf16.msra.mxu0 %v308
    %384 = vmatprep.subr.bf16.mxu0 %v307
    %385 = vmatpush2.bf16.msra.mxu0 %v306
    %386 = vmatprep.mubr.bf16.mxu0 %v149
    %387 = vmatmul.mubr.bf16.gmra.mxu0 %v148
    %v388 = vpop.f32.mrf.mxu0
    %v389 = vadd.f32 %v187, %v388
    %v390 = vpop.f32.mrf.mxu0
    %v391 = vadd.f32 %v191, %v390
    %v392 = vpop.f32.mrf.mxu0
    %v393 = vpop.f32.mrf.mxu0
    %394 = vdwg.mxu0
    %v395 = vmax.f32 %v389, 0.0
    %v396 = vmax.f32 %v391, 0.0
    %v397 = vpack.c.bf16 %v395, %v395
    %v398 = vpack.c.bf16 %v396, %v396
    %v399 = vld [vmem:[#allocation4] sm:$0xff]
    %v400 = vld [vmem:[#allocation4 + $0x8] sm:$0xff]
    %v401 = vld [vmem:[#allocation4 + $0x10] sm:$0xff]
    %v402 = vld [vmem:[#allocation4 + $0x18] sm:$0xff]
    %v403 = vld [vmem:[#allocation4 + $0x20] sm:$0xff]
    %v404 = vld [vmem:[#allocation4 + $0x28] sm:$0xff]
    %v405 = vld [vmem:[#allocation4 + $0x30] sm:$0xff]
    %v406 = vld [vmem:[#allocation4 + $0x38] sm:$0xff]
    %v407 = vld [vmem:[#allocation4 + $0x40] sm:$0xff]
    %v408 = vld [vmem:[#allocation4 + $0x48] sm:$0xff]
    %v409 = vld [vmem:[#allocation4 + $0x50] sm:$0xff]
    %v410 = vld [vmem:[#allocation4 + $0x58] sm:$0xff]
    %v411 = vld [vmem:[#allocation4 + $0x60] sm:$0xff]
    %v412 = vld [vmem:[#allocation4 + $0x68] sm:$0xff]
    %v413 = vld [vmem:[#allocation4 + $0x70] sm:$0xff]
    %v414 = vld [vmem:[#allocation4 + $0x78] sm:$0xff]
    %v415 = vld [vmem:[#allocation4 + $0x80] sm:$0xff]
    %v416 = vld [vmem:[#allocation4 + $0x88] sm:$0xff]
    %v417 = vld [vmem:[#allocation4 + $0x90] sm:$0xff]
    %v418 = vld [vmem:[#allocation4 + $0x98] sm:$0xff]
    %v419 = vld [vmem:[#allocation4 + $0xa0] sm:$0xff]
    %v420 = vld [vmem:[#allocation4 + $0xa8] sm:$0xff]
    %v421 = vld [vmem:[#allocation4 + $0xb0] sm:$0xff]
    %v422 = vld [vmem:[#allocation4 + $0xb8] sm:$0xff]
    %v423 = vld [vmem:[#allocation4 + $0xc0] sm:$0xff]
    %v424 = vld [vmem:[#allocation4 + $0xc8] sm:$0xff]
    %v425 = vld [vmem:[#allocation4 + $0xd0] sm:$0xff]
    %v426 = vld [vmem:[#allocation4 + $0xd8] sm:$0xff]
    %v427 = vld [vmem:[#allocation4 + $0xe0] sm:$0xff]
    %v428 = vld [vmem:[#allocation4 + $0xe8] sm:$0xff]
    %v429 = vld [vmem:[#allocation4 + $0xf0] sm:$0xff]
    %v430 = vld [vmem:[#allocation4 + $0xf8] sm:$0xff]
    %v431 = vld [vmem:[%s6] sm:$0x3]
    %v433 = vlaneseq
    %v434 = vshrl.u32 %v433, 7
    %v435 = vsub.s32 0, %v434
    %v436 = vrot.slane %v431, %v435
    %v437 = vlaneseq
    %v438 = vshrl.u32 %v437, 7
    %v439 = vsub.s32 1, %v438
    %v440 = vrot.slane %v431, %v439
    %v475 = vunpack.c.l.b16 %v399
    %v476 = vunpack.c.h.b16 %v399
    %v477 = vunpack.c.l.b16 %v400
    %v478 = vunpack.c.h.b16 %v400
    %v479 = vunpack.c.l.b16 %v401
    %v480 = vunpack.c.h.b16 %v401
    %v481 = vunpack.c.l.b16 %v402
    %v482 = vunpack.c.h.b16 %v402
    %v483 = vunpack.c.l.b16 %v403
    %v484 = vunpack.c.h.b16 %v403
    %v485 = vunpack.c.l.b16 %v404
    %v486 = vunpack.c.h.b16 %v404
    %v487 = vunpack.c.l.b16 %v405
    %v488 = vunpack.c.h.b16 %v405
    %v489 = vunpack.c.l.b16 %v406
    %v490 = vunpack.c.h.b16 %v406
    %v491 = vunpack.c.l.b16 %v407
    %v492 = vunpack.c.h.b16 %v407
    %v493 = vunpack.c.l.b16 %v408
    %v494 = vunpack.c.h.b16 %v408
    %v495 = vunpack.c.l.b16 %v409
    %v496 = vunpack.c.h.b16 %v409
    %v497 = vunpack.c.l.b16 %v410
    %v498 = vunpack.c.h.b16 %v410
    %v499 = vunpack.c.l.b16 %v411
    %v500 = vunpack.c.h.b16 %v411
    %v501 = vunpack.c.l.b16 %v412
    %v502 = vunpack.c.h.b16 %v412
    %v503 = vunpack.c.l.b16 %v413
    %v504 = vunpack.c.h.b16 %v413
    %v505 = vunpack.c.l.b16 %v414
    %v506 = vunpack.c.h.b16 %v414
    %v507 = vunpack.c.l.b16 %v415
    %v508 = vunpack.c.h.b16 %v415
    %v509 = vunpack.c.l.b16 %v416
    %v510 = vunpack.c.h.b16 %v416
    %v511 = vunpack.c.l.b16 %v417
    %v512 = vunpack.c.h.b16 %v417
    %v513 = vunpack.c.l.b16 %v418
    %v514 = vunpack.c.h.b16 %v418
    %v515 = vunpack.c.l.b16 %v419
    %v516 = vunpack.c.h.b16 %v419
    %v517 = vunpack.c.l.b16 %v420
    %v518 = vunpack.c.h.b16 %v420
    %v519 = vunpack.c.l.b16 %v421
    %v520 = vunpack.c.h.b16 %v421
    %v521 = vunpack.c.l.b16 %v422
    %v522 = vunpack.c.h.b16 %v422
    %v523 = vunpack.c.l.b16 %v423
    %v524 = vunpack.c.h.b16 %v423
    %v525 = vunpack.c.l.b16 %v424
    %v526 = vunpack.c.h.b16 %v424
    %v527 = vunpack.c.l.b16 %v425
    %v528 = vunpack.c.h.b16 %v425
    %v529 = vunpack.c.l.b16 %v426
    %v530 = vunpack.c.h.b16 %v426
    %v531 = vunpack.c.l.b16 %v427
    %v532 = vunpack.c.h.b16 %v427
    %v533 = vunpack.c.l.b16 %v428
    %v534 = vunpack.c.h.b16 %v428
    %v535 = vunpack.c.l.b16 %v429
    %v536 = vunpack.c.h.b16 %v429
    %v537 = vunpack.c.l.b16 %v430
    %v538 = vunpack.c.h.b16 %v430
    %v539 = vpack.c.b16 %v477, %v475
    %v540 = vpack.c.b16 %v478, %v476
    %v541 = vpack.c.b16 %v481, %v479
    %v542 = vpack.c.b16 %v482, %v480
    %v543 = vpack.c.b16 %v485, %v483
    %v544 = vpack.c.b16 %v486, %v484
    %v545 = vpack.c.b16 %v489, %v487
    %v546 = vpack.c.b16 %v490, %v488
    %v547 = vpack.c.b16 %v493, %v491
    %v548 = vpack.c.b16 %v494, %v492
    %v549 = vpack.c.b16 %v497, %v495
    %v550 = vpack.c.b16 %v498, %v496
    %v551 = vpack.c.b16 %v501, %v499
    %v552 = vpack.c.b16 %v502, %v500
    %v553 = vpack.c.b16 %v505, %v503
    %v554 = vpack.c.b16 %v506, %v504
    %v555 = vpack.c.b16 %v509, %v507
    %v556 = vpack.c.b16 %v510, %v508
    %v557 = vpack.c.b16 %v513, %v511
    %v558 = vpack.c.b16 %v514, %v512
    %v559 = vpack.c.b16 %v517, %v515
    %v560 = vpack.c.b16 %v518, %v516
    %v561 = vpack.c.b16 %v521, %v519
    %v562 = vpack.c.b16 %v522, %v520
    %v563 = vpack.c.b16 %v525, %v523
    %v564 = vpack.c.b16 %v526, %v524
    %v565 = vpack.c.b16 %v529, %v527
    %v566 = vpack.c.b16 %v530, %v528
    %v567 = vpack.c.b16 %v533, %v531
    %v568 = vpack.c.b16 %v534, %v532
    %v569 = vpack.c.b16 %v537, %v535
    %v570 = vpack.c.b16 %v538, %v536
    %603 = vmatprep.subr.bf16.mxu0 %v554
    %604 = vmatpush1.bf16.msra.mxu0 %v553
    %605 = vmatprep.subr.bf16.mxu0 %v552
    %606 = vmatpush1.bf16.msra.mxu0 %v551
    %607 = vmatprep.subr.bf16.mxu0 %v550
    %608 = vmatpush1.bf16.msra.mxu0 %v549
    %609 = vmatprep.subr.bf16.mxu0 %v548
    %610 = vmatpush1.bf16.msra.mxu0 %v547
    %611 = vmatprep.subr.bf16.mxu0 %v546
    %612 = vmatpush1.bf16.msra.mxu0 %v545
    %613 = vmatprep.subr.bf16.mxu0 %v544
    %614 = vmatpush1.bf16.msra.mxu0 %v543
    %615 = vmatprep.subr.bf16.mxu0 %v542
    %616 = vmatpush1.bf16.msra.mxu0 %v541
    %617 = vmatprep.subr.bf16.mxu0 %v540
    %618 = vmatpush1.bf16.msra.mxu0 %v539
    %619 = vmatprep.subr.bf16.mxu0 %v570
    %620 = vmatpush2.bf16.msra.mxu0 %v569
    %621 = vmatprep.subr.bf16.mxu0 %v568
    %622 = vmatpush2.bf16.msra.mxu0 %v567
    %623 = vmatprep.subr.bf16.mxu0 %v566
    %624 = vmatpush2.bf16.msra.mxu0 %v565
    %625 = vmatprep.subr.bf16.mxu0 %v564
    %626 = vmatpush2.bf16.msra.mxu0 %v563
    %627 = vmatprep.subr.bf16.mxu0 %v562
    %628 = vmatpush2.bf16.msra.mxu0 %v561
    %629 = vmatprep.subr.bf16.mxu0 %v560
    %630 = vmatpush2.bf16.msra.mxu0 %v559
    %631 = vmatprep.subr.bf16.mxu0 %v558
    %632 = vmatpush2.bf16.msra.mxu0 %v557
    %633 = vmatprep.subr.bf16.mxu0 %v556
    %634 = vmatpush2.bf16.msra.mxu0 %v555
    %635 = vmatprep.mubr.bf16.mxu0 %v398
    %636 = vmatmul.mubr.bf16.gmra.mxu0 %v397
    %v637 = vpop.f32.mrf.mxu0
    %v638 = vadd.f32 %v436, %v637
    %v639 = vpop.f32.mrf.mxu0
    %v640 = vadd.f32 %v440, %v639
    %v641 = vpop.f32.mrf.mxu0
    %v642 = vpop.f32.mrf.mxu0
    %643 = vdwg.mxu0
    %v644 = vmax.f32 %v638, 0.0
    %v645 = vmax.f32 %v640, 0.0
    %v646 = vpack.c.bf16 %v644, %v644
    %v647 = vpack.c.bf16 %v645, %v645
    %v648 = vld [vmem:[#allocation6] sm:$0xf]
    %v649 = vld [vmem:[#allocation6 + $0x4] sm:$0xf]
    %v650 = vld [vmem:[#allocation6 + $0x8] sm:$0xf]
    %v651 = vld [vmem:[#allocation6 + $0xc] sm:$0xf]
    %v652 = vld [vmem:[#allocation6 + $0x10] sm:$0xf]
    %v653 = vld [vmem:[#allocation6 + $0x14] sm:$0xf]
    %v654 = vld [vmem:[#allocation6 + $0x18] sm:$0xf]
    %v655 = vld [vmem:[#allocation6 + $0x1c] sm:$0xf]
    %v656 = vld [vmem:[#allocation6 + $0x20] sm:$0xf]
    %v657 = vld [vmem:[#allocation6 + $0x24] sm:$0xf]
    %v658 = vld [vmem:[#allocation6 + $0x28] sm:$0xf]
    %v659 = vld [vmem:[#allocation6 + $0x2c] sm:$0xf]
    %v660 = vld [vmem:[#allocation6 + $0x30] sm:$0xf]
    %v661 = vld [vmem:[#allocation6 + $0x34] sm:$0xf]
    %v662 = vld [vmem:[#allocation6 + $0x38] sm:$0xf]
    %v663 = vld [vmem:[#allocation6 + $0x3c] sm:$0xf]
    %v664 = vld [vmem:[#allocation6 + $0x40] sm:$0xf]
    %v665 = vld [vmem:[#allocation6 + $0x44] sm:$0xf]
    %v666 = vld [vmem:[#allocation6 + $0x48] sm:$0xf]
    %v667 = vld [vmem:[#allocation6 + $0x4c] sm:$0xf]
    %v668 = vld [vmem:[#allocation6 + $0x50] sm:$0xf]
    %v669 = vld [vmem:[#allocation6 + $0x54] sm:$0xf]
    %v670 = vld [vmem:[#allocation6 + $0x58] sm:$0xf]
    %v671 = vld [vmem:[#allocation6 + $0x5c] sm:$0xf]
    %v672 = vld [vmem:[#allocation6 + $0x60] sm:$0xf]
    %v673 = vld [vmem:[#allocation6 + $0x64] sm:$0xf]
    %v674 = vld [vmem:[#allocation6 + $0x68] sm:$0xf]
    %v675 = vld [vmem:[#allocation6 + $0x6c] sm:$0xf]
    %v676 = vld [vmem:[#allocation6 + $0x70] sm:$0xf]
    %v677 = vld [vmem:[#allocation6 + $0x74] sm:$0xf]
    %v678 = vld [vmem:[#allocation6 + $0x78] sm:$0xf]
    %v679 = vld [vmem:[#allocation6 + $0x7c] sm:$0xf]
    %v680 = vld [vmem:[%s8] sm:$0x1]
    %v682 = vlaneseq
    %v683 = vshrl.u32 %v682, 7
    %v684 = vsub.s32 0, %v683
    %v685 = vrot.slane %v680, %v684
    %v719 = vunpack.c.l.b16 %v648
    %v720 = vunpack.c.l.b16 %v649
    %v721 = vunpack.c.l.b16 %v650
    %v722 = vunpack.c.l.b16 %v651
    %v723 = vunpack.c.l.b16 %v652
    %v724 = vunpack.c.l.b16 %v653
    %v725 = vunpack.c.l.b16 %v654
    %v726 = vunpack.c.l.b16 %v655
    %v727 = vunpack.c.l.b16 %v656
    %v728 = vunpack.c.l.b16 %v657
    %v729 = vunpack.c.l.b16 %v658
    %v730 = vunpack.c.l.b16 %v659
    %v731 = vunpack.c.l.b16 %v660
    %v732 = vunpack.c.l.b16 %v661
    %v733 = vunpack.c.l.b16 %v662
    %v734 = vunpack.c.l.b16 %v663
    %v735 = vunpack.c.l.b16 %v664
    %v736 = vunpack.c.l.b16 %v665
    %v737 = vunpack.c.l.b16 %v666
    %v738 = vunpack.c.l.b16 %v667
    %v739 = vunpack.c.l.b16 %v668
    %v740 = vunpack.c.l.b16 %v669
    %v741 = vunpack.c.l.b16 %v670
    %v742 = vunpack.c.l.b16 %v671
    %v743 = vunpack.c.l.b16 %v672
    %v744 = vunpack.c.l.b16 %v673
    %v745 = vunpack.c.l.b16 %v674
    %v746 = vunpack.c.l.b16 %v675
    %v747 = vunpack.c.l.b16 %v676
    %v748 = vunpack.c.l.b16 %v677
    %v749 = vunpack.c.l.b16 %v678
    %v750 = vunpack.c.l.b16 %v679
    %v751 = vpack.c.b16 %v720, %v719
    %v752 = vpack.c.b16 %v722, %v721
    %v753 = vpack.c.b16 %v724, %v723
    %v754 = vpack.c.b16 %v726, %v725
    %v755 = vpack.c.b16 %v728, %v727
    %v756 = vpack.c.b16 %v730, %v729
    %v757 = vpack.c.b16 %v732, %v731
    %v758 = vpack.c.b16 %v734, %v733
    %v759 = vpack.c.b16 %v736, %v735
    %v760 = vpack.c.b16 %v738, %v737
    %v761 = vpack.c.b16 %v740, %v739
    %v762 = vpack.c.b16 %v742, %v741
    %v763 = vpack.c.b16 %v744, %v743
    %v764 = vpack.c.b16 %v746, %v745
    %v765 = vpack.c.b16 %v748, %v747
    %v766 = vpack.c.b16 %v750, %v749
    %783 = vmatprep.subr.bf16.mxu0 0
    %784 = vmatpush1.bf16.msra.mxu0 %v758
    %785 = vmatprep.subr.bf16.mxu0 0
    %786 = vmatpush1.bf16.msra.mxu0 %v757
    %787 = vmatprep.subr.bf16.mxu0 0
    %788 = vmatpush1.bf16.msra.mxu0 %v756
    %789 = vmatprep.subr.bf16.mxu0 0
    %790 = vmatpush1.bf16.msra.mxu0 %v755
    %791 = vmatprep.subr.bf16.mxu0 0
    %792 = vmatpush1.bf16.msra.mxu0 %v754
    %793 = vmatprep.subr.bf16.mxu0 0
    %794 = vmatpush1.bf16.msra.mxu0 %v753
    %795 = vmatprep.subr.bf16.mxu0 0
    %796 = vmatpush1.bf16.msra.mxu0 %v752
    %797 = vmatprep.subr.bf16.mxu0 0
    %798 = vmatpush1.bf16.msra.mxu0 %v751
    %799 = vmatprep.subr.bf16.mxu0 0
    %800 = vmatpush2.bf16.msra.mxu0 %v766
    %801 = vmatprep.subr.bf16.mxu0 0
    %802 = vmatpush2.bf16.msra.mxu0 %v765
    %803 = vmatprep.subr.bf16.mxu0 0
    %804 = vmatpush2.bf16.msra.mxu0 %v764
    %805 = vmatprep.subr.bf16.mxu0 0
    %806 = vmatpush2.bf16.msra.mxu0 %v763
    %807 = vmatprep.subr.bf16.mxu0 0
    %808 = vmatpush2.bf16.msra.mxu0 %v762
    %809 = vmatprep.subr.bf16.mxu0 0
    %810 = vmatpush2.bf16.msra.mxu0 %v761
    %811 = vmatprep.subr.bf16.mxu0 0
    %812 = vmatpush2.bf16.msra.mxu0 %v760
    %813 = vmatprep.subr.bf16.mxu0 0
    %814 = vmatpush2.bf16.msra.mxu0 %v759
    %815 = vmatprep.mubr.bf16.mxu0 %v647
    %816 = vmatmul.mubr.bf16.gmra.mxu0 %v646
    %v817 = vpop.f32.mrf.mxu0
    %v818 = vadd.f32 %v685, %v817
    %v819 = vpop.f32.mrf.mxu0
    %v820 = vpop.f32.mrf.mxu0
    %v821 = vpop.f32.mrf.mxu0
    %822 = vdwg.mxu0
    %823 = vst [vmem:[%s9] sm:$0xff] %v818
    // Predicated region
    $region50: #{model_forward.1} parent=1 // pred_check
      _
    $region51: #{model_forward.1} parent=1 // pred_check_branch
      %825 = sbr.rel (0) target = $region53
    $region52: #{model_forward.1} parent=1 // pred_region
      _
    $region53: #{model_forward.1} parent=1 // pred_fallthru
      _
    // Predicated region
    $region54: #{model_forward.1} parent=1 // pred_check
      _
    $region55: #{model_forward.1} parent=1 // pred_check_branch
      %827 = sbr.rel (0) target = $region57
    $region56: #{model_forward.1} parent=1 // pred_region
      _
    $region57: #{model_forward.1} parent=1 // pred_fallthru
      _
    %828 = vsyncpa [#allocation3], 1
    %829 = vsyncpa [#allocation5], 1

</llo_original>
